<compile_context>
chip_gen: v6e
topology: v6e:2x2x1
jax: 0.10.0
libtpu: 0.0.40
codegen_flags: <defaults>
</compile_context>

<pallas_src>
import functools

import jax
import jax.numpy as jnp
from jax import lax
from jax.experimental import pallas as pl
from jax.experimental.pallas import tpu as pltpu

BOUNDARIES_SLOPE = 0.01   # negative branch multiplier is -BOUNDARIES_SLOPE
KH, KW = 3, 3
_LANE_PAD = 128           # lane-tile aligned zero pad on each end of flat H*W
_K_PAD = 32               # im2col rows: 27 tap*cin + 1 bias row + 4 zero rows


def _conv3x3_leaky_kernel(x_ref, w_ref, o_ref, stack_ref, *, W):
    """Fused 3x3 same-conv (+bias) + where(v>0, v, -slope*v).

    x_ref:     (N, Cin, H*W)    f32  flattened-spatial NCHW input
    w_ref:     (Cout, K_PAD)    f32  packed [27 tap*cin cols | bias col | 0s]
    o_ref:     (N, Cout, H*W)   f32  output (reshapes to NCHW for free)
    stack_ref: (K_PAD, N*H*W)   f32  im2col scratch, batch folded into lanes
    """
    N, Cin, HW = x_ref.shape
    Cout = o_ref.shape[1]
    NHW = N * HW
    bias_row = Cin * KH * KW                                   # = 27

    # Init im2col stack: zero everywhere (covers the K padding rows), then a
    # constant-ones row so the bias folds into the single MXU dot.
    stack_ref[...] = jnp.zeros_like(stack_ref)
    stack_ref[bias_row:bias_row + 1, :] = jnp.ones((1, NHW), jnp.float32)

    # Per-lane column (w) index for the left/right image-boundary masks.
    lane = lax.broadcasted_iota(jnp.int32, (1, HW), 1)
    if W & (W - 1) == 0:
        w_idx = lane & (W - 1)
    else:
        w_idx = lax.rem(lane, W)
    left_ok = w_idx >= 1          # a real column exists to the left  (dw = -1)
    right_ok = w_idx < (W - 1)    # a real column exists to the right (dw = +1)

    # Build the im2col stack: 9 lane-shifted taps per image, written at
    # sublane offsets Cin*t and 128-aligned lane offsets n*HW.
    for n in range(N):
        xn = x_ref[n]                                          # (Cin, HW)
        zpad = jnp.zeros((Cin, _LANE_PAD), jnp.float32)
        xz = jnp.concatenate([zpad, xn, zpad], axis=-1)        # aligned concat
        for kh in range(KH):
            for kw in range(KW):
                dh, dw = kh - 1, kw - 1
                start = _LANE_PAD + dh * W + dw
                col = xz[:, start:start + HW]                  # (Cin, HW)
                # Row (h) overruns land in the zero pad; only the w-wrap into
                # the neighbouring image row needs masking.
                if dw == -1:
                    col = jnp.where(left_ok, col, 0.0)
                elif dw == 1:
                    col = jnp.where(right_ok, col, 0.0)
                t = kh * KW + kw
                stack_ref[Cin * t:Cin * (t + 1), n * HW:(n + 1) * HW] = col

    # One K=K_PAD MXU dot over the whole batch (bias included).
    acc = lax.dot_general(
        w_ref[...], stack_ref[...],
        dimension_numbers=(((1,), (0,)), ((), ())),
        preferred_element_type=jnp.float32)                    # (Cout, N*HW)

    v = jnp.where(acc > 0, acc, acc * (-BOUNDARIES_SLOPE))

    # Single coalesced store; the per-image lane splits at n*HW are 128-aligned.
    o_ref[...] = jnp.stack(
        [v[:, n * HW:(n + 1) * HW] for n in range(N)], axis=0).astype(o_ref.dtype)


def pack_params(weight_oihw, bias, k_pad=_K_PAD):
    """One-time parameter transform (hoisted out of the per-call path).

    Packs the OIHW conv weight + bias into the (Cout, k_pad) matrix the kernel
    consumes: column index = (kh*KW + kw)*Cin + ci, then the bias column, then
    zero padding up to k_pad.
    """
    Cout, Cin, kh, kw = weight_oihw.shape
    k_rows = kh * kw * Cin
    assert k_rows + 1 <= k_pad
    w_taps = jnp.transpose(weight_oihw, (0, 2, 3, 1)).reshape(Cout, k_rows)
    return jnp.concatenate(
        [w_taps.astype(jnp.float32),
         bias.reshape(Cout, 1).astype(jnp.float32),
         jnp.zeros((Cout, k_pad - k_rows - 1), jnp.float32)],
        axis=1)


@jax.jit
def model3_forward(x_nchw, w_packed):
    """x_nchw: (N, Cin, H, W) f32, w_packed: (Cout, K_PAD) -> (N, Cout, H, W)."""
    N, Cin, H, W = x_nchw.shape
    Cout, k_pad = w_packed.shape
    HW = H * W
    assert W + 1 <= _LANE_PAD, "kernel assumes W < 128 (pad covers one row +/- 1 col)"
    assert Cin * KH * KW + 1 <= k_pad

    x_flat = x_nchw.reshape(N, Cin, HW)                        # bitcast

    out_flat = pl.pallas_call(
        functools.partial(_conv3x3_leaky_kernel, W=W),
        out_shape=jax.ShapeDtypeStruct((N, Cout, HW), jnp.float32),
        in_specs=[
            pl.BlockSpec(memory_space=pltpu.MemorySpace.VMEM),
            pl.BlockSpec(memory_space=pltpu.MemorySpace.VMEM),
        ],
        out_specs=pl.BlockSpec(memory_space=pltpu.MemorySpace.VMEM),
        scratch_shapes=[pltpu.VMEM((k_pad, N * HW), jnp.float32)],
        cost_estimate=pl.CostEstimate(
            flops=2 * Cout * k_pad * N * HW,
            transcendentals=0,
            bytes_accessed=4 * (N * Cin * HW + Cout * k_pad + N * Cout * HW)),
    )(x_flat, w_packed)

    return out_flat.reshape(N, Cout, H, W)                     # bitcast: NCHW


def reference_forward(x_nchw, weight_oihw, bias):
    v1 = lax.conv_general_dilated(
        x_nchw, weight_oihw, window_strides=(1, 1), padding=((1, 1), (1, 1)),
        dimension_numbers=("NCHW", "OIHW", "NCHW"))
    v1 = v1 + bias.reshape(1, -1, 1, 1)
    return jnp.where(v1 > 0, v1, v1 * (-BOUNDARIES_SLOPE))


if __name__ == "__main__":
    key = jax.random.PRNGKey(0)
    k_x, k_w, k_b = jax.random.split(key, 3)

    N, Cin, H, W, Cout = 2, 3, 16, 16, 8
    x = jax.random.normal(k_x, (N, Cin, H, W), dtype=jnp.float32)

    # Deterministic "Conv2d(3, 8, 3)" parameters (Kaiming-uniform-ish bounds).
    fan_in = Cin * KH * KW
    bound = 1.0 / (fan_in ** 0.5)
    weight = jax.random.uniform(k_w, (Cout, Cin, KH, KW),
                                minval=-bound, maxval=bound, dtype=jnp.float32)
    bias = jax.random.uniform(k_b, (Cout,),
                              minval=-bound, maxval=bound, dtype=jnp.float32)

    # One-time weight/bias packing (outside the per-call path).
    w_packed = pack_params(weight, bias)

    out = model3_forward(x, w_packed)
    jax.block_until_ready(out)

    ref = reference_forward(x, weight, bias)
    assert out.shape == (N, Cout, H, W)
    max_err = float(jnp.max(jnp.abs(out - ref)))
    assert jnp.allclose(out, ref, atol=1e-4, rtol=1e-4), max_err

    print("KERNEL_OK")
</pallas_src>

<mosaic_0001>
module attributes {stable_mosaic.version = 11 : i64} {
  func.func @_conv3x3_leaky_kernel(%arg0: memref<2x3x256xf32, #tpu.memory_space<vmem>>, %arg1: memref<8x32xf32, #tpu.memory_space<vmem>>, %arg2: memref<2x8x256xf32, #tpu.memory_space<vmem>>, %arg3: memref<32x512xf32, #tpu.memory_space<vmem>>) attributes {dimension_semantics = [], scalar_prefetch = 0 : i64, scratch_operands = 1 : i64, tpu.core_type = #tpu.core_type<tc>} {
    %cst = arith.constant 0.000000e+00 : f32
    %0 = vector.broadcast %cst : f32 to vector<32x512xf32>
    %c0 = arith.constant 0 : index
    %c0_0 = arith.constant 0 : index
    %1 = vector.load %arg3[%c0, %c0_0] : memref<32x512xf32, #tpu.memory_space<vmem>>, vector<32x512xf32>
    tpu.vector_store %arg3[%c0, %c0_0], %0 {strides = array<i32>} : memref<32x512xf32, #tpu.memory_space<vmem>>, vector<32x512xf32>,
    %cst_1 = arith.constant 1.000000e+00 : f32
    %2 = vector.broadcast %cst_1 : f32 to vector<1x512xf32>
    %c27 = arith.constant 27 : index
    %c0_2 = arith.constant 0 : index
    %3 = vector.load %arg3[%c27, %c0_2] : memref<32x512xf32, #tpu.memory_space<vmem>>, vector<1x512xf32>
    tpu.vector_store %arg3[%c27, %c0_2], %2 {strides = array<i32>} : memref<32x512xf32, #tpu.memory_space<vmem>>, vector<1x512xf32>,
    %4 = tpu.iota {dimensions = array<i32: 1>} : vector<1x256xi32>
    %c15_i32 = arith.constant 15 : i32
    %5 = vector.broadcast %c15_i32 : i32 to vector<1x256xi32>
    %6 = arith.andi %4, %5 : vector<1x256xi32>
    %c1_i32 = arith.constant 1 : i32
    %7 = vector.broadcast %c1_i32 : i32 to vector<1x256xi32>
    %8 = arith.cmpi sge, %6, %7 : vector<1x256xi32>
    %c15_i32_3 = arith.constant 15 : i32
    %9 = vector.broadcast %c15_i32_3 : i32 to vector<1x256xi32>
    %10 = arith.cmpi slt, %6, %9 : vector<1x256xi32>
    %c0_4 = arith.constant 0 : index
    %c0_5 = arith.constant 0 : index
    %c0_6 = arith.constant 0 : index
    %11 = vector.load %arg0[%c0_4, %c0_5, %c0_6] : memref<2x3x256xf32, #tpu.memory_space<vmem>>, vector<1x3x256xf32>
    %12 = vector.shape_cast %11 : vector<1x3x256xf32> to vector<3x256xf32>
    %cst_7 = arith.constant 0.000000e+00 : f32
    %13 = vector.broadcast %cst_7 : f32 to vector<3x128xf32>
    %14 = tpu.concatenate %13, %12, %13 in 1 : vector<3x128xf32>, vector<3x256xf32>, vector<3x128xf32> -> vector<3x512xf32>
    %15 = vector.extract_strided_slice %14 {offsets = [0, 111], sizes = [3, 256], strides = [1, 1]} : vector<3x512xf32> to vector<3x256xf32>
    %cst_8 = arith.constant 0.000000e+00 : f32
    %16 = vector.shape_cast %8 : vector<1x256xi1> to vector<1x256xi1>
    %17 = vector.broadcast %16 : vector<1x256xi1> to vector<3x256xi1>
    %18 = vector.broadcast %cst_8 : f32 to vector<3x256xf32>
    %19 = arith.select %17, %15, %18 : vector<3x256xi1>, vector<3x256xf32>
    %c0_9 = arith.constant 0 : index
    %c0_10 = arith.constant 0 : index
    %20 = vector.load %arg3[%c0_9, %c0_10] : memref<32x512xf32, #tpu.memory_space<vmem>>, vector<3x256xf32>
    tpu.vector_store %arg3[%c0_9, %c0_10], %19 {strides = array<i32>} : memref<32x512xf32, #tpu.memory_space<vmem>>, vector<3x256xf32>,
    %21 = vector.extract_strided_slice %14 {offsets = [0, 112], sizes = [3, 256], strides = [1, 1]} : vector<3x512xf32> to vector<3x256xf32>
    %c3 = arith.constant 3 : index
    %c0_11 = arith.constant 0 : index
    %22 = vector.load %arg3[%c3, %c0_11] : memref<32x512xf32, #tpu.memory_space<vmem>>, vector<3x256xf32>
    tpu.vector_store %arg3[%c3, %c0_11], %21 {strides = array<i32>} : memref<32x512xf32, #tpu.memory_space<vmem>>, vector<3x256xf32>,
    %23 = vector.extract_strided_slice %14 {offsets = [0, 113], sizes = [3, 256], strides = [1, 1]} : vector<3x512xf32> to vector<3x256xf32>
    %cst_12 = arith.constant 0.000000e+00 : f32
    %24 = vector.shape_cast %10 : vector<1x256xi1> to vector<1x256xi1>
    %25 = vector.broadcast %24 : vector<1x256xi1> to vector<3x256xi1>
    %26 = vector.broadcast %cst_12 : f32 to vector<3x256xf32>
    %27 = arith.select %25, %23, %26 : vector<3x256xi1>, vector<3x256xf32>
    %c6 = arith.constant 6 : index
    %c0_13 = arith.constant 0 : index
    %28 = vector.load %arg3[%c6, %c0_13] : memref<32x512xf32, #tpu.memory_space<vmem>>, vector<3x256xf32>
    tpu.vector_store %arg3[%c6, %c0_13], %27 {strides = array<i32>} : memref<32x512xf32, #tpu.memory_space<vmem>>, vector<3x256xf32>,
    %29 = vector.extract_strided_slice %14 {offsets = [0, 127], sizes = [3, 256], strides = [1, 1]} : vector<3x512xf32> to vector<3x256xf32>
    %cst_14 = arith.constant 0.000000e+00 : f32
    %30 = vector.shape_cast %8 : vector<1x256xi1> to vector<1x256xi1>
    %31 = vector.broadcast %30 : vector<1x256xi1> to vector<3x256xi1>
    %32 = vector.broadcast %cst_14 : f32 to vector<3x256xf32>
    %33 = arith.select %31, %29, %32 : vector<3x256xi1>, vector<3x256xf32>
    %c9 = arith.constant 9 : index
    %c0_15 = arith.constant 0 : index
    %34 = vector.load %arg3[%c9, %c0_15] : memref<32x512xf32, #tpu.memory_space<vmem>>, vector<3x256xf32>
    tpu.vector_store %arg3[%c9, %c0_15], %33 {strides = array<i32>} : memref<32x512xf32, #tpu.memory_space<vmem>>, vector<3x256xf32>,
    %35 = vector.extract_strided_slice %14 {offsets = [0, 128], sizes = [3, 256], strides = [1, 1]} : vector<3x512xf32> to vector<3x256xf32>
    %c12 = arith.constant 12 : index
    %c0_16 = arith.constant 0 : index
    %36 = vector.load %arg3[%c12, %c0_16] : memref<32x512xf32, #tpu.memory_space<vmem>>, vector<3x256xf32>
    tpu.vector_store %arg3[%c12, %c0_16], %35 {strides = array<i32>} : memref<32x512xf32, #tpu.memory_space<vmem>>, vector<3x256xf32>,
    %37 = vector.extract_strided_slice %14 {offsets = [0, 129], sizes = [3, 256], strides = [1, 1]} : vector<3x512xf32> to vector<3x256xf32>
    %cst_17 = arith.constant 0.000000e+00 : f32
    %38 = vector.shape_cast %10 : vector<1x256xi1> to vector<1x256xi1>
    %39 = vector.broadcast %38 : vector<1x256xi1> to vector<3x256xi1>
    %40 = vector.broadcast %cst_17 : f32 to vector<3x256xf32>
    %41 = arith.select %39, %37, %40 : vector<3x256xi1>, vector<3x256xf32>
    %c15 = arith.constant 15 : index
    %c0_18 = arith.constant 0 : index
    %42 = vector.load %arg3[%c15, %c0_18] : memref<32x512xf32, #tpu.memory_space<vmem>>, vector<3x256xf32>
    tpu.vector_store %arg3[%c15, %c0_18], %41 {strides = array<i32>} : memref<32x512xf32, #tpu.memory_space<vmem>>, vector<3x256xf32>,
    %43 = vector.extract_strided_slice %14 {offsets = [0, 143], sizes = [3, 256], strides = [1, 1]} : vector<3x512xf32> to vector<3x256xf32>
    %cst_19 = arith.constant 0.000000e+00 : f32
    %44 = vector.shape_cast %8 : vector<1x256xi1> to vector<1x256xi1>
    %45 = vector.broadcast %44 : vector<1x256xi1> to vector<3x256xi1>
    %46 = vector.broadcast %cst_19 : f32 to vector<3x256xf32>
    %47 = arith.select %45, %43, %46 : vector<3x256xi1>, vector<3x256xf32>
    %c18 = arith.constant 18 : index
    %c0_20 = arith.constant 0 : index
    %48 = vector.load %arg3[%c18, %c0_20] : memref<32x512xf32, #tpu.memory_space<vmem>>, vector<3x256xf32>
    tpu.vector_store %arg3[%c18, %c0_20], %47 {strides = array<i32>} : memref<32x512xf32, #tpu.memory_space<vmem>>, vector<3x256xf32>,
    %49 = vector.extract_strided_slice %14 {offsets = [0, 144], sizes = [3, 256], strides = [1, 1]} : vector<3x512xf32> to vector<3x256xf32>
    %c21 = arith.constant 21 : index
    %c0_21 = arith.constant 0 : index
    %50 = vector.load %arg3[%c21, %c0_21] : memref<32x512xf32, #tpu.memory_space<vmem>>, vector<3x256xf32>
    tpu.vector_store %arg3[%c21, %c0_21], %49 {strides = array<i32>} : memref<32x512xf32, #tpu.memory_space<vmem>>, vector<3x256xf32>,
    %51 = vector.extract_strided_slice %14 {offsets = [0, 145], sizes = [3, 256], strides = [1, 1]} : vector<3x512xf32> to vector<3x256xf32>
    %cst_22 = arith.constant 0.000000e+00 : f32
    %52 = vector.shape_cast %10 : vector<1x256xi1> to vector<1x256xi1>
    %53 = vector.broadcast %52 : vector<1x256xi1> to vector<3x256xi1>
    %54 = vector.broadcast %cst_22 : f32 to vector<3x256xf32>
    %55 = arith.select %53, %51, %54 : vector<3x256xi1>, vector<3x256xf32>
    %c24 = arith.constant 24 : index
    %c0_23 = arith.constant 0 : index
    %56 = vector.load %arg3[%c24, %c0_23] : memref<32x512xf32, #tpu.memory_space<vmem>>, vector<3x256xf32>
    tpu.vector_store %arg3[%c24, %c0_23], %55 {strides = array<i32>} : memref<32x512xf32, #tpu.memory_space<vmem>>, vector<3x256xf32>,
    %c1 = arith.constant 1 : index
    %c0_24 = arith.constant 0 : index
    %c0_25 = arith.constant 0 : index
    %57 = vector.load %arg0[%c1, %c0_24, %c0_25] : memref<2x3x256xf32, #tpu.memory_space<vmem>>, vector<1x3x256xf32>
    %58 = vector.shape_cast %57 : vector<1x3x256xf32> to vector<3x256xf32>
    %cst_26 = arith.constant 0.000000e+00 : f32
    %59 = vector.broadcast %cst_26 : f32 to vector<3x128xf32>
    %60 = tpu.concatenate %59, %58, %59 in 1 : vector<3x128xf32>, vector<3x256xf32>, vector<3x128xf32> -> vector<3x512xf32>
    %61 = vector.extract_strided_slice %60 {offsets = [0, 111], sizes = [3, 256], strides = [1, 1]} : vector<3x512xf32> to vector<3x256xf32>
    %cst_27 = arith.constant 0.000000e+00 : f32
    %62 = vector.shape_cast %8 : vector<1x256xi1> to vector<1x256xi1>
    %63 = vector.broadcast %62 : vector<1x256xi1> to vector<3x256xi1>
    %64 = vector.broadcast %cst_27 : f32 to vector<3x256xf32>
    %65 = arith.select %63, %61, %64 : vector<3x256xi1>, vector<3x256xf32>
    %c0_28 = arith.constant 0 : index
    %c256 = arith.constant 256 : index
    %66 = vector.load %arg3[%c0_28, %c256] : memref<32x512xf32, #tpu.memory_space<vmem>>, vector<3x256xf32>
    tpu.vector_store %arg3[%c0_28, %c256], %65 {strides = array<i32>} : memref<32x512xf32, #tpu.memory_space<vmem>>, vector<3x256xf32>,
    %67 = vector.extract_strided_slice %60 {offsets = [0, 112], sizes = [3, 256], strides = [1, 1]} : vector<3x512xf32> to vector<3x256xf32>
    %c3_29 = arith.constant 3 : index
    %c256_30 = arith.constant 256 : index
    %68 = vector.load %arg3[%c3_29, %c256_30] : memref<32x512xf32, #tpu.memory_space<vmem>>, vector<3x256xf32>
    tpu.vector_store %arg3[%c3_29, %c256_30], %67 {strides = array<i32>} : memref<32x512xf32, #tpu.memory_space<vmem>>, vector<3x256xf32>,
    %69 = vector.extract_strided_slice %60 {offsets = [0, 113], sizes = [3, 256], strides = [1, 1]} : vector<3x512xf32> to vector<3x256xf32>
    %cst_31 = arith.constant 0.000000e+00 : f32
    %70 = vector.shape_cast %10 : vector<1x256xi1> to vector<1x256xi1>
    %71 = vector.broadcast %70 : vector<1x256xi1> to vector<3x256xi1>
    %72 = vector.broadcast %cst_31 : f32 to vector<3x256xf32>
    %73 = arith.select %71, %69, %72 : vector<3x256xi1>, vector<3x256xf32>
    %c6_32 = arith.constant 6 : index
    %c256_33 = arith.constant 256 : index
    %74 = vector.load %arg3[%c6_32, %c256_33] : memref<32x512xf32, #tpu.memory_space<vmem>>, vector<3x256xf32>
    tpu.vector_store %arg3[%c6_32, %c256_33], %73 {strides = array<i32>} : memref<32x512xf32, #tpu.memory_space<vmem>>, vector<3x256xf32>,
    %75 = vector.extract_strided_slice %60 {offsets = [0, 127], sizes = [3, 256], strides = [1, 1]} : vector<3x512xf32> to vector<3x256xf32>
    %cst_34 = arith.constant 0.000000e+00 : f32
    %76 = vector.shape_cast %8 : vector<1x256xi1> to vector<1x256xi1>
    %77 = vector.broadcast %76 : vector<1x256xi1> to vector<3x256xi1>
    %78 = vector.broadcast %cst_34 : f32 to vector<3x256xf32>
    %79 = arith.select %77, %75, %78 : vector<3x256xi1>, vector<3x256xf32>
    %c9_35 = arith.constant 9 : index
    %c256_36 = arith.constant 256 : index
    %80 = vector.load %arg3[%c9_35, %c256_36] : memref<32x512xf32, #tpu.memory_space<vmem>>, vector<3x256xf32>
    tpu.vector_store %arg3[%c9_35, %c256_36], %79 {strides = array<i32>} : memref<32x512xf32, #tpu.memory_space<vmem>>, vector<3x256xf32>,
    %81 = vector.extract_strided_slice %60 {offsets = [0, 128], sizes = [3, 256], strides = [1, 1]} : vector<3x512xf32> to vector<3x256xf32>
    %c12_37 = arith.constant 12 : index
    %c256_38 = arith.constant 256 : index
    %82 = vector.load %arg3[%c12_37, %c256_38] : memref<32x512xf32, #tpu.memory_space<vmem>>, vector<3x256xf32>
    tpu.vector_store %arg3[%c12_37, %c256_38], %81 {strides = array<i32>} : memref<32x512xf32, #tpu.memory_space<vmem>>, vector<3x256xf32>,
    %83 = vector.extract_strided_slice %60 {offsets = [0, 129], sizes = [3, 256], strides = [1, 1]} : vector<3x512xf32> to vector<3x256xf32>
    %cst_39 = arith.constant 0.000000e+00 : f32
    %84 = vector.shape_cast %10 : vector<1x256xi1> to vector<1x256xi1>
    %85 = vector.broadcast %84 : vector<1x256xi1> to vector<3x256xi1>
    %86 = vector.broadcast %cst_39 : f32 to vector<3x256xf32>
    %87 = arith.select %85, %83, %86 : vector<3x256xi1>, vector<3x256xf32>
    %c15_40 = arith.constant 15 : index
    %c256_41 = arith.constant 256 : index
    %88 = vector.load %arg3[%c15_40, %c256_41] : memref<32x512xf32, #tpu.memory_space<vmem>>, vector<3x256xf32>
    tpu.vector_store %arg3[%c15_40, %c256_41], %87 {strides = array<i32>} : memref<32x512xf32, #tpu.memory_space<vmem>>, vector<3x256xf32>,
    %89 = vector.extract_strided_slice %60 {offsets = [0, 143], sizes = [3, 256], strides = [1, 1]} : vector<3x512xf32> to vector<3x256xf32>
    %cst_42 = arith.constant 0.000000e+00 : f32
    %90 = vector.shape_cast %8 : vector<1x256xi1> to vector<1x256xi1>
    %91 = vector.broadcast %90 : vector<1x256xi1> to vector<3x256xi1>
    %92 = vector.broadcast %cst_42 : f32 to vector<3x256xf32>
    %93 = arith.select %91, %89, %92 : vector<3x256xi1>, vector<3x256xf32>
    %c18_43 = arith.constant 18 : index
    %c256_44 = arith.constant 256 : index
    %94 = vector.load %arg3[%c18_43, %c256_44] : memref<32x512xf32, #tpu.memory_space<vmem>>, vector<3x256xf32>
    tpu.vector_store %arg3[%c18_43, %c256_44], %93 {strides = array<i32>} : memref<32x512xf32, #tpu.memory_space<vmem>>, vector<3x256xf32>,
    %95 = vector.extract_strided_slice %60 {offsets = [0, 144], sizes = [3, 256], strides = [1, 1]} : vector<3x512xf32> to vector<3x256xf32>
    %c21_45 = arith.constant 21 : index
    %c256_46 = arith.constant 256 : index
    %96 = vector.load %arg3[%c21_45, %c256_46] : memref<32x512xf32, #tpu.memory_space<vmem>>, vector<3x256xf32>
    tpu.vector_store %arg3[%c21_45, %c256_46], %95 {strides = array<i32>} : memref<32x512xf32, #tpu.memory_space<vmem>>, vector<3x256xf32>,
    %97 = vector.extract_strided_slice %60 {offsets = [0, 145], sizes = [3, 256], strides = [1, 1]} : vector<3x512xf32> to vector<3x256xf32>
    %cst_47 = arith.constant 0.000000e+00 : f32
    %98 = vector.shape_cast %10 : vector<1x256xi1> to vector<1x256xi1>
    %99 = vector.broadcast %98 : vector<1x256xi1> to vector<3x256xi1>
    %100 = vector.broadcast %cst_47 : f32 to vector<3x256xf32>
    %101 = arith.select %99, %97, %100 : vector<3x256xi1>, vector<3x256xf32>
    %c24_48 = arith.constant 24 : index
    %c256_49 = arith.constant 256 : index
    %102 = vector.load %arg3[%c24_48, %c256_49] : memref<32x512xf32, #tpu.memory_space<vmem>>, vector<3x256xf32>
    tpu.vector_store %arg3[%c24_48, %c256_49], %101 {strides = array<i32>} : memref<32x512xf32, #tpu.memory_space<vmem>>, vector<3x256xf32>,
    %c0_50 = arith.constant 0 : index
    %c0_51 = arith.constant 0 : index
    %103 = vector.load %arg1[%c0_50, %c0_51] : memref<8x32xf32, #tpu.memory_space<vmem>>, vector<8x32xf32>
    %c0_52 = arith.constant 0 : index
    %c0_53 = arith.constant 0 : index
    %104 = vector.load %arg3[%c0_52, %c0_53] : memref<32x512xf32, #tpu.memory_space<vmem>>, vector<32x512xf32>
    %cst_54 = arith.constant dense<0.000000e+00> : vector<8x512xf32>
    %105 = tpu.matmul %103, %104, %cst_54 {dimension_numbers = #tpu.dot_dimension_numbers<[1], [0], [0], [1], [0, 0, 1, 1], [], []>} : vector<8x32xf32>, vector<32x512xf32>, vector<8x512xf32> -> vector<8x512xf32>
    %cst_55 = arith.constant 0.000000e+00 : f32
    %106 = vector.broadcast %cst_55 : f32 to vector<8x512xf32>
    %107 = arith.cmpf ogt, %105, %106 : vector<8x512xf32>
    %cst_56 = arith.constant -0.00999999977 : f32
    %108 = vector.broadcast %cst_56 : f32 to vector<8x512xf32>
    %109 = arith.mulf %105, %108 : vector<8x512xf32>
    %110 = arith.select %107, %105, %109 : vector<8x512xi1>, vector<8x512xf32>
    %111 = vector.extract_strided_slice %110 {offsets = [0, 0], sizes = [8, 256], strides = [1, 1]} : vector<8x512xf32> to vector<8x256xf32>
    %112 = vector.extract_strided_slice %110 {offsets = [0, 256], sizes = [8, 256], strides = [1, 1]} : vector<8x512xf32> to vector<8x256xf32>
    %113 = vector.shape_cast %111 : vector<8x256xf32> to vector<1x8x256xf32>
    %114 = vector.shape_cast %112 : vector<8x256xf32> to vector<1x8x256xf32>
    %115 = tpu.concatenate %113, %114 in 0 : vector<1x8x256xf32>, vector<1x8x256xf32> -> vector<2x8x256xf32>
    %c0_57 = arith.constant 0 : index
    %c0_58 = arith.constant 0 : index
    %c0_59 = arith.constant 0 : index
    %116 = vector.load %arg2[%c0_57, %c0_58, %c0_59] : memref<2x8x256xf32, #tpu.memory_space<vmem>>, vector<2x8x256xf32>
    tpu.vector_store %arg2[%c0_57, %c0_58, %c0_59], %115 {strides = array<i32>} : memref<2x8x256xf32, #tpu.memory_space<vmem>>, vector<2x8x256xf32>,
    return
  }
}

</mosaic_0001>

<llo_original>
// kernel: model3_forward.1
$region0: #{model3_forward.1}
  #allocation0 [shape = 'u32[]', space=smem, size = 0x4, offset = 0x4, fixed_abs, tag = 'smem constant byte address 0x4 - core index']
  #allocation1 [shape = 'u32[144,128]{1,0:T(1,128)}', space=vmem, size = 0x12000, scoped, tag = 'internal scratch']
  #allocation2 [shape = 'f32[32,512]{1,0:T(8,128)}', space=vmem, size = 0x10000, scoped, tag = 'scratch operand']
  %s0 = inlined_call_operand.vmem [shape: f32[2,3,256], index: 0, kind: input, shape index: {}]
  %s1 = inlined_call_operand.vmem [shape: f32[8,32], index: 1, kind: input, shape index: {}]
  %s2 = inlined_call_operand.vmem [shape: f32[2,8,256], index: 2, kind: output, shape index: {}]
  %s3 = sld [smem:[#allocation0]]
  $region18: #{model3_forward.1} parent=0
    _
  %s5 = ssub.s32 1, %s3
  %s6 = scalar_select 0, %s5, %s3
  // Predicated region
  $region2: #{model3_forward.1} parent=0 // pred_check
    _
  $region3: #{model3_forward.1} parent=0 // pred_check_branch
    %8 = sbr.rel (0) target = $region5
  $region4: #{model3_forward.1} parent=0 // pred_region
    _
  $region5: #{model3_forward.1} parent=0 // pred_fallthru
    _
  // Predicated region
  $region6: #{model3_forward.1} parent=0 // pred_check
    _
  $region7: #{model3_forward.1} parent=0 // pred_check_branch
    %10 = sbr.rel (0) target = $region9
  $region8: #{model3_forward.1} parent=0 // pred_region
    _
  $region9: #{model3_forward.1} parent=0 // pred_fallthru
    _
  %11 = vst [vmem:[#allocation2] sm:$0xff] 0.0
  %12 = vst [vmem:[#allocation2 + $0x8] sm:$0xff] 0.0
  %13 = vst [vmem:[#allocation2 + $0x10] sm:$0xff] 0.0
  %14 = vst [vmem:[#allocation2 + $0x18] sm:$0xff] 0.0
  %15 = vst [vmem:[#allocation2 + $0x20] sm:$0xff] 0.0
  %16 = vst [vmem:[#allocation2 + $0x28] sm:$0xff] 0.0
  %17 = vst [vmem:[#allocation2 + $0x30] sm:$0xff] 0.0
  %18 = vst [vmem:[#allocation2 + $0x38] sm:$0xff] 0.0
  %19 = vst [vmem:[#allocation2 + $0x40] sm:$0xff] 0.0
  %20 = vst [vmem:[#allocation2 + $0x48] sm:$0xff] 0.0
  %21 = vst [vmem:[#allocation2 + $0x50] sm:$0xff] 0.0
  %22 = vst [vmem:[#allocation2 + $0x58] sm:$0xff] 0.0
  %23 = vst [vmem:[#allocation2 + $0x60] sm:$0xff] 0.0
  %24 = vst [vmem:[#allocation2 + $0x68] sm:$0xff] 0.0
  %25 = vst [vmem:[#allocation2 + $0x70] sm:$0xff] 0.0
  %26 = vst [vmem:[#allocation2 + $0x78] sm:$0xff] 0.0
  %v27 = vlaneseq
  %vm28 = vcmp.ge.s32.totalorder %v27, 0
  %vm29 = vcmp.lt.s32.totalorder %v27, 512
  %vm30 = vmand %vm28, %vm29
  %s31 = scalar_lea.vmem [#allocation2], 99
  %32 = vst.msk [vmem:[%s31] ss:$8 sm:$0xf] %vm30, 1.0
  %33 = vst.msk [vmem:[%s31] ss:$8 sm:$0x0] %vm30, 1.0
  %v34 = vlaneseq
  %v35 = vand.u32 %v34, 127
  %v36 = vadd.s32 %v35, 128
  %v37 = vand.u32 %v35, 15
  %v38 = vand.u32 %v36, 15
  %vm39 = vcmp.ge.s32.totalorder %v37, 1
  %vm40 = vcmp.ge.s32.totalorder %v38, 1
  %vm41 = vcmp.lt.s32.totalorder %v37, 15
  %vm42 = vcmp.lt.s32.totalorder %v38, 15
  %v43 = vld [vmem:[%s0] sm:$0x77]
  %v45 = vcombine.high %v43, %v43
  %v46 = vsel %vm39, 1, 0
  %v47 = vsel %vm40, 1, 0
  %vm48 = vcmp.eq.s32.totalorder %v46, 1
  %vm49 = vcmp.eq.s32.totalorder %v47, 1
  %51 = vrot.lane.b32.xlu0 0.0, 17
  %v52 = vpop.permute.xlu0 %51
  %53 = vrot.lane.b32.xlu0 %v43, 17
  %v54 = vpop.permute.xlu0 %53
  %55 = vrot.lane.b32.xlu0 %v45, 17
  %v56 = vpop.permute.xlu0 %55
  %vm57 = vcmask 138240
  %v58 = vsel %vm57, %v52, %v54
  %v59 = vsel %vm57, %v54, %v56
  %v62 = vsel %vm48, %v58, 0.0
  %v63 = vsel %vm49, %v59, 0.0
  %64 = vst [vmem:[#allocation2] sm:$0x7] %v62
  %65 = vst [vmem:[#allocation2 + $0x8] sm:$0x7] %v63
  %v66 = vrot.slane 0.0, 5
  %v67 = vrot.slane %v43, 5
  %v68 = vrot.slane %v45, 5
  %69 = vrot.lane.b32.xlu0 %v66, 16
  %v70 = vpop.permute.xlu0 %69
  %71 = vrot.lane.b32.xlu0 %v67, 16
  %v72 = vpop.permute.xlu0 %71
  %73 = vrot.lane.b32.xlu0 %v68, 16
  %v74 = vpop.permute.xlu0 %73
  %vm75 = vcmask 130048
  %v76 = vsel %vm75, %v70, %v72
  %v77 = vsel %vm75, %v72, %v74
  %80 = vst [vmem:[#allocation2] sm:$0x38] %v76
  %81 = vst [vmem:[#allocation2 + $0x8] sm:$0x38] %v77
  %v82 = vsel %vm41, 1, 0
  %v83 = vsel %vm42, 1, 0
  %vm84 = vcmp.eq.s32.totalorder %v82, 1
  %vm85 = vcmp.eq.s32.totalorder %v83, 1
  %86 = vrot.lane.b32.xlu0 0.0, 15
  %v87 = vpop.permute.xlu0 %86
  %88 = vrot.lane.b32.xlu0 %v43, 15
  %v89 = vpop.permute.xlu0 %88
  %90 = vrot.lane.b32.xlu0 %v45, 15
  %v91 = vpop.permute.xlu0 %90
  %vm92 = vcmask 121856
  %v93 = vsel %vm92, %v87, %v89
  %v94 = vsel %vm92, %v89, %v91
  %v97 = vsel %vm84, %v93, 0.0
  %v98 = vsel %vm85, %v94, 0.0
  %v101 = vrot.slane %v97, 2
  %v102 = vrot.slane %v98, 2
  %105 = vst [vmem:[#allocation2] sm:$0xc0] %v101
  %106 = vst [vmem:[#allocation2 + $0x8] sm:$0xc0] %v102
  %107 = vst [vmem:[#allocation2 + $0x20] sm:$0x1] %v101
  %108 = vst [vmem:[#allocation2 + $0x28] sm:$0x1] %v102
  %109 = vrot.lane.b32.xlu0 0.0, 1
  %v110 = vpop.permute.xlu0 %109
  %111 = vrot.lane.b32.xlu0 %v43, 1
  %v112 = vpop.permute.xlu0 %111
  %113 = vrot.lane.b32.xlu0 %v45, 1
  %v114 = vpop.permute.xlu0 %113
  %vm115 = vcmask 7168
  %v116 = vsel %vm115, %v110, %v112
  %v117 = vsel %vm115, %v112, %v114
  %v120 = vsel %vm48, %v116, 0.0
  %v121 = vsel %vm49, %v117, 0.0
  %v124 = vrot.slane %v120, 7
  %v125 = vrot.slane %v121, 7
  %128 = vst [vmem:[#allocation2 + $0x20] sm:$0xe] %v124
  %129 = vst [vmem:[#allocation2 + $0x28] sm:$0xe] %v125
  %v130 = vrot.slane %v43, 4
  %v131 = vrot.slane %v45, 4
  %134 = vst [vmem:[#allocation2 + $0x20] sm:$0x70] %v130
  %135 = vst [vmem:[#allocation2 + $0x28] sm:$0x70] %v131
  %136 = vrot.lane.b32.xlu0 %v43, 127
  %v137 = vpop.permute.xlu0 %136
  %138 = vrot.lane.b32.xlu0 %v45, 127
  %v139 = vpop.permute.xlu0 %138
  %140 = vrot.lane.b32.xlu0 0.0, 127
  %v141 = vpop.permute.xlu0 %140
  %vm142 = vcmask 1039360
  %v143 = vsel %vm142, %v137, %v139
  %v144 = vsel %vm142, %v139, %v141
  %v147 = vsel %vm84, %v143, 0.0
  %v148 = vsel %vm85, %v144, 0.0
  %v151 = vrot.slane %v147, 1
  %v152 = vrot.slane %v148, 1
  %155 = vst [vmem:[#allocation2 + $0x20] sm:$0x80] %v151
  %156 = vst [vmem:[#allocation2 + $0x28] sm:$0x80] %v152
  %157 = vst [vmem:[#allocation2 + $0x40] sm:$0x3] %v151
  %158 = vst [vmem:[#allocation2 + $0x48] sm:$0x3] %v152
  %159 = vrot.lane.b32.xlu0 %v43, 113
  %v160 = vpop.permute.xlu0 %159
  %161 = vrot.lane.b32.xlu0 %v45, 113
  %v162 = vpop.permute.xlu0 %161
  %163 = vrot.lane.b32.xlu0 0.0, 113
  %v164 = vpop.permute.xlu0 %163
  %vm165 = vcmask 924672
  %v166 = vsel %vm165, %v160, %v162
  %v167 = vsel %vm165, %v162, %v164
  %v170 = vsel %vm48, %v166, 0.0
  %v171 = vsel %vm49, %v167, 0.0
  %v174 = vrot.slane %v170, 6
  %v175 = vrot.slane %v171, 6
  %178 = vst [vmem:[#allocation2 + $0x40] sm:$0x1c] %v174
  %179 = vst [vmem:[#allocation2 + $0x48] sm:$0x1c] %v175
  %v180 = vrot.slane %v43, 3
  %v181 = vrot.slane %v45, 3
  %v182 = vrot.slane 0.0, 3
  %183 = vrot.lane.b32.xlu0 %v180, 112
  %v184 = vpop.permute.xlu0 %183
  %185 = vrot.lane.b32.xlu0 %v181, 112
  %v186 = vpop.permute.xlu0 %185
  %187 = vrot.lane.b32.xlu0 %v182, 112
  %v188 = vpop.permute.xlu0 %187
  %vm189 = vcmask 916480
  %v190 = vsel %vm189, %v184, %v186
  %v191 = vsel %vm189, %v186, %v188
  %194 = vst [vmem:[#allocation2 + $0x40] sm:$0xe0] %v190
  %195 = vst [vmem:[#allocation2 + $0x48] sm:$0xe0] %v191
  %196 = vrot.lane.b32.xlu0 %v43, 111
  %v197 = vpop.permute.xlu0 %196
  %198 = vrot.lane.b32.xlu0 %v45, 111
  %v199 = vpop.permute.xlu0 %198
  %200 = vrot.lane.b32.xlu0 0.0, 111
  %v201 = vpop.permute.xlu0 %200
  %vm202 = vcmask 908288
  %v203 = vsel %vm202, %v197, %v199
  %v204 = vsel %vm202, %v199, %v201
  %v207 = vsel %vm84, %v203, 0.0
  %v208 = vsel %vm85, %v204, 0.0
  %209 = vst [vmem:[#allocation2 + $0x60] sm:$0x7] %v207
  %210 = vst [vmem:[#allocation2 + $0x68] sm:$0x7] %v208
  %s211 = scalar_lea.vmem %s0, 8
  %v212 = vld [vmem:[%s211] sm:$0x77]
  %v214 = vcombine.high %v212, %v212
  %215 = vrot.lane.b32.xlu0 %v212, 17
  %v216 = vpop.permute.xlu0 %215
  %217 = vrot.lane.b32.xlu0 %v214, 17
  %v218 = vpop.permute.xlu0 %217
  %v219 = vsel %vm57, %v52, %v216
  %v220 = vsel %vm57, %v216, %v218
  %v223 = vsel %vm48, %v219, 0.0
  %v224 = vsel %vm49, %v220, 0.0
  %225 = vst [vmem:[#allocation2 + $0x10] sm:$0x7] %v223
  %226 = vst [vmem:[#allocation2 + $0x18] sm:$0x7] %v224
  %v227 = vrot.slane %v212, 5
  %v228 = vrot.slane %v214, 5
  %229 = vrot.lane.b32.xlu0 %v227, 16
  %v230 = vpop.permute.xlu0 %229
  %231 = vrot.lane.b32.xlu0 %v228, 16
  %v232 = vpop.permute.xlu0 %231
  %v233 = vsel %vm75, %v70, %v230
  %v234 = vsel %vm75, %v230, %v232
  %237 = vst [vmem:[#allocation2 + $0x10] sm:$0x38] %v233
  %238 = vst [vmem:[#allocation2 + $0x18] sm:$0x38] %v234
  %239 = vrot.lane.b32.xlu0 %v212, 15
  %v240 = vpop.permute.xlu0 %239
  %241 = vrot.lane.b32.xlu0 %v214, 15
  %v242 = vpop.permute.xlu0 %241
  %v243 = vsel %vm92, %v87, %v240
  %v244 = vsel %vm92, %v240, %v242
  %v247 = vsel %vm84, %v243, 0.0
  %v248 = vsel %vm85, %v244, 0.0
  %v251 = vrot.slane %v247, 2
  %v252 = vrot.slane %v248, 2
  %255 = vst [vmem:[#allocation2 + $0x10] sm:$0xc0] %v251
  %256 = vst [vmem:[#allocation2 + $0x18] sm:$0xc0] %v252
  %257 = vst [vmem:[#allocation2 + $0x30] sm:$0x1] %v251
  %258 = vst [vmem:[#allocation2 + $0x38] sm:$0x1] %v252
  %259 = vrot.lane.b32.xlu0 %v212, 1
  %v260 = vpop.permute.xlu0 %259
  %261 = vrot.lane.b32.xlu0 %v214, 1
  %v262 = vpop.permute.xlu0 %261
  %v263 = vsel %vm115, %v110, %v260
  %v264 = vsel %vm115, %v260, %v262
  %v267 = vsel %vm48, %v263, 0.0
  %v268 = vsel %vm49, %v264, 0.0
  %v271 = vrot.slane %v267, 7
  %v272 = vrot.slane %v268, 7
  %275 = vst [vmem:[#allocation2 + $0x30] sm:$0xe] %v271
  %276 = vst [vmem:[#allocation2 + $0x38] sm:$0xe] %v272
  %v277 = vrot.slane %v212, 4
  %v278 = vrot.slane %v214, 4
  %281 = vst [vmem:[#allocation2 + $0x30] sm:$0x70] %v277
  %282 = vst [vmem:[#allocation2 + $0x38] sm:$0x70] %v278
  %283 = vrot.lane.b32.xlu0 %v212, 127
  %v284 = vpop.permute.xlu0 %283
  %285 = vrot.lane.b32.xlu0 %v214, 127
  %v286 = vpop.permute.xlu0 %285
  %v287 = vsel %vm142, %v284, %v286
  %v288 = vsel %vm142, %v286, %v141
  %v291 = vsel %vm84, %v287, 0.0
  %v292 = vsel %vm85, %v288, 0.0
  %v295 = vrot.slane %v291, 1
  %v296 = vrot.slane %v292, 1
  %299 = vst [vmem:[#allocation2 + $0x30] sm:$0x80] %v295
  %300 = vst [vmem:[#allocation2 + $0x38] sm:$0x80] %v296
  %301 = vst [vmem:[#allocation2 + $0x50] sm:$0x3] %v295
  %302 = vst [vmem:[#allocation2 + $0x58] sm:$0x3] %v296
  %303 = vrot.lane.b32.xlu0 %v212, 113
  %v304 = vpop.permute.xlu0 %303
  %305 = vrot.lane.b32.xlu0 %v214, 113
  %v306 = vpop.permute.xlu0 %305
  %v307 = vsel %vm165, %v304, %v306
  %v308 = vsel %vm165, %v306, %v164
  %v311 = vsel %vm48, %v307, 0.0
  %v312 = vsel %vm49, %v308, 0.0
  %v315 = vrot.slane %v311, 6
  %v316 = vrot.slane %v312, 6
  %319 = vst [vmem:[#allocation2 + $0x50] sm:$0x1c] %v315
  %320 = vst [vmem:[#allocation2 + $0x58] sm:$0x1c] %v316
  %v321 = vrot.slane %v212, 3
  %v322 = vrot.slane %v214, 3
  %323 = vrot.lane.b32.xlu0 %v321, 112
  %v324 = vpop.permute.xlu0 %323
  %325 = vrot.lane.b32.xlu0 %v322, 112
  %v326 = vpop.permute.xlu0 %325
  %v327 = vsel %vm189, %v324, %v326
  %v328 = vsel %vm189, %v326, %v188
  %331 = vst [vmem:[#allocation2 + $0x50] sm:$0xe0] %v327
  %332 = vst [vmem:[#allocation2 + $0x58] sm:$0xe0] %v328
  %333 = vrot.lane.b32.xlu0 %v212, 111
  %v334 = vpop.permute.xlu0 %333
  %335 = vrot.lane.b32.xlu0 %v214, 111
  %v336 = vpop.permute.xlu0 %335
  %v337 = vsel %vm202, %v334, %v336
  %v338 = vsel %vm202, %v336, %v201
  %v341 = vsel %vm84, %v337, 0.0
  %v342 = vsel %vm85, %v338, 0.0
  %343 = vst [vmem:[#allocation2 + $0x70] sm:$0x7] %v341
  %344 = vst [vmem:[#allocation2 + $0x78] sm:$0x7] %v342
  %v345 = vld [vmem:[%s1] sm:$0xff]
  %v346 = vld [vmem:[#allocation2] sm:$0xff]
  %v347 = vld [vmem:[#allocation2 + $0x8] sm:$0xff]
  %v348 = vld [vmem:[#allocation2 + $0x10] sm:$0xff]
  %v349 = vld [vmem:[#allocation2 + $0x18] sm:$0xff]
  %v350 = vld [vmem:[#allocation2 + $0x20] sm:$0xff]
  %v351 = vld [vmem:[#allocation2 + $0x28] sm:$0xff]
  %v352 = vld [vmem:[#allocation2 + $0x30] sm:$0xff]
  %v353 = vld [vmem:[#allocation2 + $0x38] sm:$0xff]
  %v354 = vld [vmem:[#allocation2 + $0x40] sm:$0xff]
  %v355 = vld [vmem:[#allocation2 + $0x48] sm:$0xff]
  %v356 = vld [vmem:[#allocation2 + $0x50] sm:$0xff]
  %v357 = vld [vmem:[#allocation2 + $0x58] sm:$0xff]
  %v358 = vld [vmem:[#allocation2 + $0x60] sm:$0xff]
  %v359 = vld [vmem:[#allocation2 + $0x68] sm:$0xff]
  %v360 = vld [vmem:[#allocation2 + $0x70] sm:$0xff]
  %v361 = vld [vmem:[#allocation2 + $0x78] sm:$0xff]
  %vm362 = vcmask 261120
  %v364 = vsel %vm362, %v345, 0
  %366 = vmatprep.subr.mxu0 0.0
  %367 = vmatpush1.msra.mxu0 0.0
  %368 = vmatprep.subr.mxu0 0.0
  %369 = vmatpush1.msra.mxu0 0.0
  %370 = vmatprep.subr.mxu0 0.0
  %371 = vmatpush1.msra.mxu0 0.0
  %372 = vmatprep.subr.mxu0 0.0
  %373 = vmatpush1.msra.mxu0 0.0
  %374 = vmatprep.subr.mxu0 0.0
  %375 = vmatpush1.msra.mxu0 0.0
  %376 = vmatprep.subr.mxu0 0.0
  %377 = vmatpush1.msra.mxu0 0.0
  %378 = vmatprep.subr.mxu0 0.0
  %379 = vmatpush1.msra.mxu0 0.0
  %380 = vmatprep.subr.mxu0 0.0
  %381 = vmatpush1.msra.mxu0 0.0
  %382 = vmatprep.subr.mxu0 0.0
  %383 = vmatpush1.msra.mxu0 0.0
  %384 = vmatprep.subr.mxu0 0.0
  %385 = vmatpush1.msra.mxu0 0.0
  %386 = vmatprep.subr.mxu0 0.0
  %387 = vmatpush1.msra.mxu0 0.0
  %388 = vmatprep.subr.mxu0 0.0
  %389 = vmatpush1.msra.mxu0 0.0
  %390 = vmatprep.subr.mxu0 %v359
  %391 = vmatpush1.msra.mxu0 %v358
  %392 = vmatprep.subr.mxu0 %v355
  %393 = vmatpush1.msra.mxu0 %v354
  %394 = vmatprep.subr.mxu0 %v351
  %395 = vmatpush1.msra.mxu0 %v350
  %396 = vmatprep.subr.mxu0 %v347
  %397 = vmatpush1.msra.mxu0 %v346
  %398 = vmatprep.subr.mxu0 0.0
  %399 = vmatpush2.msra.mxu0 0.0
  %400 = vmatprep.subr.mxu0 0.0
  %401 = vmatpush2.msra.mxu0 0.0
  %402 = vmatprep.subr.mxu0 0.0
  %403 = vmatpush2.msra.mxu0 0.0
  %404 = vmatprep.subr.mxu0 0.0
  %405 = vmatpush2.msra.mxu0 0.0
  %406 = vmatprep.subr.mxu0 0.0
  %407 = vmatpush2.msra.mxu0 0.0
  %408 = vmatprep.subr.mxu0 0.0
  %409 = vmatpush2.msra.mxu0 0.0
  %410 = vmatprep.subr.mxu0 0.0
  %411 = vmatpush2.msra.mxu0 0.0
  %412 = vmatprep.subr.mxu0 0.0
  %413 = vmatpush2.msra.mxu0 0.0
  %414 = vmatprep.subr.mxu0 0.0
  %415 = vmatpush2.msra.mxu0 0.0
  %416 = vmatprep.subr.mxu0 0.0
  %417 = vmatpush2.msra.mxu0 0.0
  %418 = vmatprep.subr.mxu0 0.0
  %419 = vmatpush2.msra.mxu0 0.0
  %420 = vmatprep.subr.mxu0 0.0
  %421 = vmatpush2.msra.mxu0 0.0
  %422 = vmatprep.subr.mxu0 0.0
  %423 = vmatpush2.msra.mxu0 0.0
  %424 = vmatprep.subr.mxu0 0.0
  %425 = vmatpush2.msra.mxu0 0.0
  %426 = vmatprep.subr.mxu0 0.0
  %427 = vmatpush2.msra.mxu0 0.0
  %428 = vmatprep.subr.mxu0 0.0
  %429 = vmatpush2.msra.mxu0 0.0
  %430 = vmatprep.mubr.f32.mxu0 0.0
  %431 = vmatmul.mubr.f32.gmra.mxu0 %v364
  %v432 = vpop.f32.mrf.mxu0
  %v433 = vadd.f32 0.0, %v432
  %v434 = vpop.f32.mrf.mxu0
  %v435 = vadd.f32 0.0, %v434
  %436 = vdwg.mxu0
  %437 = vmatprep.subr.mxu0 0.0
  %438 = vmatpush1.msra.mxu0 0.0
  %439 = vmatprep.subr.mxu0 0.0
  %440 = vmatpush1.msra.mxu0 0.0
  %441 = vmatprep.subr.mxu0 0.0
  %442 = vmatpush1.msra.mxu0 0.0
  %443 = vmatprep.subr.mxu0 0.0
  %444 = vmatpush1.msra.mxu0 0.0
  %445 = vmatprep.subr.mxu0 0.0
  %446 = vmatpush1.msra.mxu0 0.0
  %447 = vmatprep.subr.mxu0 0.0
  %448 = vmatpush1.msra.mxu0 0.0
  %449 = vmatprep.subr.mxu0 0.0
  %450 = vmatpush1.msra.mxu0 0.0
  %451 = vmatprep.subr.mxu0 0.0
  %452 = vmatpush1.msra.mxu0 0.0
  %453 = vmatprep.subr.mxu0 0.0
  %454 = vmatpush1.msra.mxu0 0.0
  %455 = vmatprep.subr.mxu0 0.0
  %456 = vmatpush1.msra.mxu0 0.0
  %457 = vmatprep.subr.mxu0 0.0
  %458 = vmatpush1.msra.mxu0 0.0
  %459 = vmatprep.subr.mxu0 0.0
  %460 = vmatpush1.msra.mxu0 0.0
  %461 = vmatprep.subr.mxu0 %v361
  %462 = vmatpush1.msra.mxu0 %v360
  %463 = vmatprep.subr.mxu0 %v357
  %464 = vmatpush1.msra.mxu0 %v356
  %465 = vmatprep.subr.mxu0 %v353
  %466 = vmatpush1.msra.mxu0 %v352
  %467 = vmatprep.subr.mxu0 %v349
  %468 = vmatpush1.msra.mxu0 %v348
  %469 = vmatprep.subr.mxu0 0.0
  %470 = vmatpush2.msra.mxu0 0.0
  %471 = vmatprep.subr.mxu0 0.0
  %472 = vmatpush2.msra.mxu0 0.0
  %473 = vmatprep.subr.mxu0 0.0
  %474 = vmatpush2.msra.mxu0 0.0
  %475 = vmatprep.subr.mxu0 0.0
  %476 = vmatpush2.msra.mxu0 0.0
  %477 = vmatprep.subr.mxu0 0.0
  %478 = vmatpush2.msra.mxu0 0.0
  %479 = vmatprep.subr.mxu0 0.0
  %480 = vmatpush2.msra.mxu0 0.0
  %481 = vmatprep.subr.mxu0 0.0
  %482 = vmatpush2.msra.mxu0 0.0
  %483 = vmatprep.subr.mxu0 0.0
  %484 = vmatpush2.msra.mxu0 0.0
  %485 = vmatprep.subr.mxu0 0.0
  %486 = vmatpush2.msra.mxu0 0.0
  %487 = vmatprep.subr.mxu0 0.0
  %488 = vmatpush2.msra.mxu0 0.0
  %489 = vmatprep.subr.mxu0 0.0
  %490 = vmatpush2.msra.mxu0 0.0
  %491 = vmatprep.subr.mxu0 0.0
  %492 = vmatpush2.msra.mxu0 0.0
  %493 = vmatprep.subr.mxu0 0.0
  %494 = vmatpush2.msra.mxu0 0.0
  %495 = vmatprep.subr.mxu0 0.0
  %496 = vmatpush2.msra.mxu0 0.0
  %497 = vmatprep.subr.mxu0 0.0
  %498 = vmatpush2.msra.mxu0 0.0
  %499 = vmatprep.subr.mxu0 0.0
  %500 = vmatpush2.msra.mxu0 0.0
  %501 = vmatprep.mubr.f32.mxu0 0.0
  %502 = vmatmul.mubr.f32.gmra.mxu0 %v364
  %v503 = vpop.f32.mrf.mxu0
  %v504 = vadd.f32 0.0, %v503
  %v505 = vpop.f32.mrf.mxu0
  %v506 = vadd.f32 0.0, %v505
  %507 = vdwg.mxu0
  %vm508 = vcmp.gt.f32.partialorder %v433, 0.0
  %vm509 = vcmp.gt.f32.partialorder %v435, 0.0
  %vm510 = vcmp.gt.f32.partialorder %v504, 0.0
  %vm511 = vcmp.gt.f32.partialorder %v506, 0.0
  %v512 = vmul.f32 %v433, -0.01
  %v513 = vmul.f32 %v435, -0.01
  %v514 = vmul.f32 %v504, -0.01
  %v515 = vmul.f32 %v506, -0.01
  %v516 = vsel %vm508, %v433, %v512
  %v517 = vsel %vm509, %v435, %v513
  %v518 = vsel %vm510, %v504, %v514
  %v519 = vsel %vm511, %v506, %v515
  %520 = vst [vmem:[%s2] sm:$0xff] %v516
  %521 = vst [vmem:[%s2 + $0x8] sm:$0xff] %v517
  %522 = vst [vmem:[%s2 + $0x10] sm:$0xff] %v518
  %523 = vst [vmem:[%s2 + $0x18] sm:$0xff] %v519
  // Predicated region
  $region10: #{model3_forward.1} parent=0 // pred_check
    _
  $region11: #{model3_forward.1} parent=0 // pred_check_branch
    %525 = sbr.rel (0) target = $region13
  $region12: #{model3_forward.1} parent=0 // pred_region
    _
  $region13: #{model3_forward.1} parent=0 // pred_fallthru
    _
  // Predicated region
  $region14: #{model3_forward.1} parent=0 // pred_check
    _
  $region15: #{model3_forward.1} parent=0 // pred_check_branch
    %527 = sbr.rel (0) target = $region17
  $region16: #{model3_forward.1} parent=0 // pred_region
    _
  $region17: #{model3_forward.1} parent=0 // pred_fallthru
    _

</llo_original>
